<compile_context>
chip_gen: v5e
topology: v5e:2x2
jax: 0.10.0
libtpu: 0.0.40
codegen_flags: <defaults>
</compile_context>

<pallas_src>
import jax
import jax.numpy as jnp
from jax.experimental import pallas as pl
from jax.experimental.pallas import tpu as pltpu

_LANE = 128
_TARGET_BLOCK_BYTES = 2 * 1024 * 1024  # ~2 MiB blocks: 4x resident (dbl-buffered
                                       # in+out) = 8 MiB, fits every generation's
                                       # default scoped-VMEM budget (incl. v5e).


def _copy_kernel(x_ref, o_ref):
    # Pure element copy of the current lane-dense tile.
    o_ref[...] = x_ref[...]


def reshape_forward(x, c_size, h_size, w_size):
    """Pallas equivalent of Reshape(c_size, h_size, w_size)(x).

    Accepts any input whose elements flatten to B * c * h * w (matching
    torch's x.view(x.shape[0], c, h, w) contract).
    """
    b = x.shape[0]
    n = c_size * h_size * w_size
    total = b * n
    assert x.size == total, "input cannot be viewed as (B, c, h, w)"
    out_shape = (b, c_size, h_size, w_size)

    if total % _LANE != 0:
        # Can't form a lane-dense (M, 128) view; the reshape itself is
        # metadata-only so just do it directly (semantically identical).
        # TODO(synk): no Pallas copy path for sizes not divisible by 128.
        return x.reshape(out_shape)

    # Lane/sublane-dense flat view: (M, 128), row-major == torch .view order.
    m = total // _LANE
    x_flat = x.reshape(m, _LANE)

    itemsize = jnp.dtype(x.dtype).itemsize
    row_bytes = _LANE * itemsize
    # Rows per block: ~2 MiB, rounded down to a multiple of 8 sublanes.
    target_rows = max(8, (_TARGET_BLOCK_BYTES // row_bytes) // 8 * 8)

    if m <= target_rows:
        # Single block covering the full array (full-extent block is always
        # a legal block shape, even if m is not a multiple of 8).
        tile_m = m
        grid_m = 1
    else:
        tile_m = target_rows
        grid_m = pl.cdiv(m, tile_m)  # partial last block handled by Pallas

    out_flat = pl.pallas_call(
        _copy_kernel,
        out_shape=jax.ShapeDtypeStruct((m, _LANE), x.dtype),
        grid_spec=pl.GridSpec(
            grid=(grid_m,),
            in_specs=[pl.BlockSpec((tile_m, _LANE), lambda i: (i, 0))],
            out_specs=pl.BlockSpec((tile_m, _LANE), lambda i: (i, 0)),
        ),
        compiler_params=pltpu.CompilerParams(
            # "parallel" lets v7x shard the copy across its 2 TensorCores.
            dimension_semantics=("parallel",),
            vmem_limit_bytes=32 * 1024 * 1024,
        ),
        # Allow XLA to donate the input buffer for the output (no extra HBM
        # allocation when the input value is no longer needed).
        input_output_aliases={0: 0},
    )(x_flat)

    # Zero-cost metadata reshape to NCHW, exactly like torch .view.
    return out_flat.reshape(out_shape)


if __name__ == "__main__":
    # Small shapes consistent with the module: B=2, C=4, H=16, W=16.
    B, C, H, W = 2, 4, 16, 16
    key = jax.random.PRNGKey(0)
    # Typical use: flat feature vector per batch element after a Linear layer.
    x = jax.random.normal(key, (B, C * H * W), dtype=jnp.float32)

    # Reference (== torch .view semantics) computed up front.
    ref = x.reshape(B, C, H, W)

    y = reshape_forward(x, C, H, W)
    y = jax.block_until_ready(y)

    assert y.shape == (B, C, H, W)
    assert y.dtype == x.dtype
    assert jnp.array_equal(y, ref)

    print("KERNEL_OK")
</pallas_src>

<mosaic_0001>
module attributes {stable_mosaic.version = 11 : i64} {
  func.func @_copy_kernel(%arg0: i32, %arg1: memref<16x128xf32, #tpu.memory_space<vmem>>, %arg2: memref<16x128xf32, #tpu.memory_space<vmem>>) attributes {dimension_semantics = [#tpu.dimension_semantics<parallel>], iteration_bounds = array<i64: 1>, scalar_prefetch = 0 : i64, scratch_operands = 0 : i64, tpu.core_type = #tpu.core_type<tc>, window_params = [{transform_indices = @transform_0, window_bounds = array<i64: 16, 128>}, {transform_indices = @transform_1, window_bounds = array<i64: 16, 128>}]} {
    %c0 = arith.constant 0 : index
    %c0_0 = arith.constant 0 : index
    %0 = vector.load %arg1[%c0, %c0_0] : memref<16x128xf32, #tpu.memory_space<vmem>>, vector<16x128xf32>
    %c0_1 = arith.constant 0 : index
    %c0_2 = arith.constant 0 : index
    %1 = vector.load %arg2[%c0_1, %c0_2] : memref<16x128xf32, #tpu.memory_space<vmem>>, vector<16x128xf32>
    tpu.vector_store %arg2[%c0_1, %c0_2], %0 {strides = array<i32>} : memref<16x128xf32, #tpu.memory_space<vmem>>, vector<16x128xf32>,
    return
  }
  func.func @transform_0(%arg0: i32) -> (i32, i32) {
    %c0_i32 = arith.constant 0 : i32
    %c0_i32_0 = arith.constant 0 : i32
    return %arg0, %c0_i32 : i32, i32
  }
  func.func @transform_1(%arg0: i32) -> (i32, i32) {
    %c0_i32 = arith.constant 0 : i32
    %c0_i32_0 = arith.constant 0 : i32
    return %arg0, %c0_i32 : i32, i32
  }
}

</mosaic_0001>

<llo_original>
// kernel: tpu_custom_call.1
$region0: #{tpu_custom_call.1}
  #allocation0 [shape = 'u32[]', space=smem, size = 0x4, offset = 0x4, fixed_abs, tag = 'smem constant byte address 0x4 - core index']
  #allocation1 [shape = 'u32[72,128]{1,0:T(1,128)}', space=vmem, size = 0x9000, scoped, tag = 'internal scratch']
  %s0 = inlined_call_operand.hbm [shape: f32[16,128], index: 0, kind: input, shape index: {}, may-alias: {0,1}]
  %s1 = inlined_call_operand.hbm [shape: f32[16,128], index: 1, kind: output, shape index: {}, may-alias: {0,1}]
  %s2 = sld [smem:[#allocation0]]
  $region18: #{tpu_custom_call.1} parent=0
    _
  %s4 = ssub.s32 1, %s2
  %s5 = scalar_select 0, %s4, %s2
  $region1: #{tpu_custom_call.1} parent=0
    #allocation2 [shape = 'u8[8192]{0}', space=vmem, size = 0x2000, scoped, tag = 'input window, operand 0, single buffered']
    #allocation3 [shape = 's32[1]{0}', space=sflag, size = 0x4, scoped, tag = 'scoped memory for tpu_custom_call.1']
    #allocation4 [shape = 's32[1]{0}', space=sflag, size = 0x4, scoped, tag = 'scoped memory for tpu_custom_call.1']
    #allocation5 [shape = 'u8[8192]{0}', space=vmem, size = 0x2000, scoped, tag = 'output window, operand 0, single buffered']
    %6 = vsyncpa [#allocation3], 0
    %7 = vsyncpa [#allocation4], 0
    // Predicated region
    $region2: #{tpu_custom_call.1} parent=1 // pred_check
      _
    $region3: #{tpu_custom_call.1} parent=1 // pred_check_branch
      %9 = sbr.rel (0) target = $region5
    $region4: #{tpu_custom_call.1} parent=1 // pred_region
      %11 = vsyncadd [#allocation3], 0
      %s12 = sshll.u32 %s0, 4
      %s13 = int_to_ptr.hbm [resolvable:$true] %s12
      %s14 = sshll.u32 [#allocation2], 4
      %s15 = int_to_ptr.vmem [resolvable:$true] %s14
      %20 = dma.hbm_to_vmem [thread:$0]  %s13, 256, %s15, [#allocation3], 128, 128, 8
    $region5: #{tpu_custom_call.1} parent=1 // pred_fallthru
      _
    // Predicated region
    $region6: #{tpu_custom_call.1} parent=1 // pred_check
      _
    $region7: #{tpu_custom_call.1} parent=1 // pred_check_branch
      %22 = sbr.rel (0) target = $region9
    $region8: #{tpu_custom_call.1} parent=1 // pred_region
      %24 = dma.done [#allocation3], 256
    $region9: #{tpu_custom_call.1} parent=1 // pred_fallthru
      _
    %v25 = vld [vmem:[#allocation2] sm:$0xff]
    %v26 = vld [vmem:[#allocation2 + $0x8] sm:$0xff]
    %27 = vst [vmem:[#allocation5] sm:$0xff] %v25
    %28 = vst [vmem:[#allocation5 + $0x8] sm:$0xff] %v26
    // Predicated region
    $region10: #{tpu_custom_call.1} parent=1 // pred_check
      _
    $region11: #{tpu_custom_call.1} parent=1 // pred_check_branch
      %30 = sbr.rel (0) target = $region13
    $region12: #{tpu_custom_call.1} parent=1 // pred_region
      %32 = vsyncadd [#allocation4], 0
      %s33 = sshll.u32 [#allocation5], 4
      %s34 = int_to_ptr.vmem [resolvable:$true] %s33
      %s35 = sshll.u32 %s1, 4
      %s36 = int_to_ptr.hbm [resolvable:$true] %s35
      %41 = dma.vmem_to_hbm [thread:$0]  %s34, 256, %s36, [#allocation4], 128, 128, 8
    $region13: #{tpu_custom_call.1} parent=1 // pred_fallthru
      _
    // Predicated region
    $region14: #{tpu_custom_call.1} parent=1 // pred_check
      _
    $region15: #{tpu_custom_call.1} parent=1 // pred_check_branch
      %43 = sbr.rel (0) target = $region17
    $region16: #{tpu_custom_call.1} parent=1 // pred_region
      %45 = dma.done [#allocation4], 256
    $region17: #{tpu_custom_call.1} parent=1 // pred_fallthru
      _
    %46 = vsyncpa [#allocation3], 1
    %47 = vsyncpa [#allocation4], 1

</llo_original>
